<compile_context>
chip_gen: v6e
topology: v6e:2x2x1
jax: 0.10.0
libtpu: 0.0.40
codegen_flags: <defaults>
</compile_context>

<pallas_src>
import jax
import jax.numpy as jnp
from jax.experimental import pallas as pl
from jax.experimental.pallas import tpu as pltpu


def _round_up(v, m):
    return ((v + m - 1) // m) * m


def _cdiv(a, b):
    return -(-a // b)


# ---------------------------------------------------------------------------
# Kernels (weights arrive pre-transposed: (K, N) / (N, N)); K-reduction grid.
# ---------------------------------------------------------------------------
def _mlp_expand_kernel(x_ref, w1_ref, b1_ref, w2_ref, b2_ref, o_ref, acc_ref):
    k = pl.program_id(1)

    @pl.when(k == 0)
    def _():
        acc_ref[...] = jnp.zeros_like(acc_ref)

    # h += x_tile @ W1_tile   (f32 accumulation on the MXU)
    acc_ref[...] += jnp.dot(x_ref[...], w1_ref[...],
                            preferred_element_type=jnp.float32)

    @pl.when(k == pl.num_programs(1) - 1)
    def _():
        # fused bias-add + ReLU in f32, then second linear (expand path)
        h = jnp.maximum(acc_ref[...] + b1_ref[...], 0.0)
        o = jnp.dot(h.astype(w2_ref.dtype), w2_ref[...],
                    preferred_element_type=jnp.float32)
        o_ref[...] = (o + b2_ref[...]).astype(o_ref.dtype)


def _mlp_plain_kernel(x_ref, w1_ref, b1_ref, o_ref, acc_ref):
    k = pl.program_id(1)

    @pl.when(k == 0)
    def _():
        acc_ref[...] = jnp.zeros_like(acc_ref)

    acc_ref[...] += jnp.dot(x_ref[...], w1_ref[...],
                            preferred_element_type=jnp.float32)

    @pl.when(k == pl.num_programs(1) - 1)
    def _():
        o_ref[...] = (acc_ref[...] + b1_ref[...]).astype(o_ref.dtype)


# ---------------------------------------------------------------------------
# VMEM budgeting (generation-aware, double-buffering-aware)
# ---------------------------------------------------------------------------
def _vmem_capacity_bytes():
    try:
        return int(pltpu.get_tpu_info().vmem_capacity_bytes)
    except Exception:
        return 64 * 1024 * 1024   # conservative fallback (v7x per-TC VMEM)


def _vmem_need_bytes(tb, tk, n, cdt_isz, out_isz, expand):
    need = 2 * tb * tk * cdt_isz        # x tiles (double-buffered)
    need += 2 * tk * n * cdt_isz        # W1 tiles (double-buffered)
    need += 2 * tb * n * out_isz        # output tiles (double-buffered)
    need += tb * n * 4                  # f32 accumulator scratch
    need += 2 * tb * n * 4              # epilogue f32 temporaries (h, o)
    need += 2 * 2 * n * 4               # biases (double-buffered)
    if expand:
        need += 2 * n * n * cdt_isz     # W2 (double-buffered, grid-resident)
    return need


# ---------------------------------------------------------------------------
# One-time parameter preparation (layout plumbing hoisted out of forward)
# ---------------------------------------------------------------------------
def prepare_params(params, expand_dim, *, compute_dtype=jnp.bfloat16,
                   tile_b=512, tile_k=None):
    """Transpose PyTorch-layout weights to (in, out), zero-pad feature dims to
    lane-aligned multiples of 128, and pick batch/K tiles against a
    generation-derived VMEM budget.  Call ONCE; mlp_forward only touches x."""
    num_classes, in_dim = params["w1"].shape
    expand = bool(expand_dim)
    if expand:
        # Buggy-module forward only shape-checks when expand_dim == num_classes.
        assert params["w2"].shape[1] == num_classes, \
            "expand path requires expand_dim == num_classes"

    cdt = jnp.dtype(compute_dtype)
    cdt_isz = cdt.itemsize
    out_isz = 4  # budget worst case: f32 outputs

    n_pad = _round_up(num_classes, 128)
    k128 = _round_up(in_dim, 128)

    # --- tile sizing against the VMEM budget ---------------------------------
    vmem_cap = _vmem_capacity_bytes()
    budget = int(0.70 * (vmem_cap - 8 * 1024 * 1024))

    max_tk = k128 if tile_k is None else min(k128, _round_up(int(tile_k), 128))
    max_tk = max(128, min(max_tk, 2048))
    nk = _cdiv(k128, max_tk)
    tk = _round_up(_cdiv(k128, nk), 128)             # balanced K tile, x128
    tb = max(8, _round_up(int(tile_b), 8))

    while (_vmem_need_bytes(tb, tk, n_pad, cdt_isz, out_isz, expand) > budget
           and tk > 128):
        tk = max(128, _round_up(tk // 2, 128))
    while (_vmem_need_bytes(tb, tk, n_pad, cdt_isz, out_isz, expand) > budget
           and tb > 8):
        tb = max(8, (tb // 2) // 8 * 8)

    k_pad = _round_up(in_dim, tk)

    # --- one-time weight layout plumbing --------------------------------------
    w1_t = params["w1"].T.astype(cdt)
    if (k_pad, n_pad) != (in_dim, num_classes):
        w1_t = jnp.zeros((k_pad, n_pad), cdt).at[:in_dim, :num_classes].set(w1_t)
    b1_p = jnp.zeros((1, n_pad), jnp.float32).at[:, :num_classes].set(
        params["b1"].reshape(1, -1).astype(jnp.float32))

    prep = dict(expand=expand, in_dim=in_dim, num_classes=num_classes,
                cdt=cdt, k_pad=k_pad, n_pad=n_pad, tile_k=tk, tile_b=tb,
                vmem_cap=vmem_cap, w1_t=w1_t, b1_p=b1_p)
    if expand:
        w2_t = params["w2"].T.astype(cdt)
        if n_pad != num_classes:
            w2_t = jnp.zeros((n_pad, n_pad), cdt).at[
                :num_classes, :num_classes].set(w2_t)
        b2_p = jnp.zeros((1, n_pad), jnp.float32).at[:, :num_classes].set(
            params["b2"].reshape(1, -1).astype(jnp.float32))
        prep["w2_t"] = w2_t
        prep["b2_p"] = b2_p
    return prep


# ---------------------------------------------------------------------------
# Forward pass (only x is padded/cast per call)
# ---------------------------------------------------------------------------
def mlp_forward(x, prep):
    B, in_dim = x.shape
    assert in_dim == prep["in_dim"]
    expand = prep["expand"]
    cdt = prep["cdt"]
    k_pad, n_pad = prep["k_pad"], prep["n_pad"]
    tk = prep["tile_k"]
    num_classes = prep["num_classes"]
    out_dtype = x.dtype
    out_isz = jnp.dtype(out_dtype).itemsize

    # Batch tile: respect the prepared VMEM-fit cap, stay a multiple of 8, and
    # guarantee >=2 batch blocks (both v7x TensorCores) when B allows it.
    tb = min(prep["tile_b"], _round_up(B, 8))
    if B >= 16:
        tb = min(tb, _round_up(_cdiv(B, 2), 8))
    tb = max(8, tb // 8 * 8)

    B_pad = _round_up(B, tb)
    grid = (B_pad // tb, k_pad // tk)

    # Pad/cast x only when actually needed (aligned shapes pass straight through).
    if B_pad == B and k_pad == in_dim:
        x_p = x.astype(cdt)
    else:
        x_p = jnp.zeros((B_pad, k_pad), cdt).at[:B, :in_dim].set(x.astype(cdt))

    x_spec = pl.BlockSpec((tb, tk), lambda i, k: (i, k))
    w1_spec = pl.BlockSpec((tk, n_pad), lambda i, k: (k, 0))
    b_spec = pl.BlockSpec((1, n_pad), lambda i, k: (0, 0))      # grid-resident
    o_spec = pl.BlockSpec((tb, n_pad), lambda i, k: (i, 0))
    out_shape = jax.ShapeDtypeStruct((B_pad, n_pad), out_dtype)
    scratch = [pltpu.VMEM((tb, n_pad), jnp.float32)]

    vmem_need = _vmem_need_bytes(tb, tk, n_pad, cdt.itemsize, out_isz, expand)
    vmem_cap = prep["vmem_cap"]
    vmem_limit = int(min(vmem_cap - 4 * 1024 * 1024,
                         max(int(1.5 * vmem_need), 32 * 1024 * 1024)))
    cparams = pltpu.CompilerParams(
        dimension_semantics=("parallel", "arbitrary"),
        vmem_limit_bytes=vmem_limit)

    flops = 2 * B_pad * k_pad * n_pad + (2 * B_pad * n_pad * n_pad if expand else 0)
    bytes_accessed = (B_pad * k_pad * cdt.itemsize
                      + grid[0] * k_pad * n_pad * cdt.itemsize   # W1 re-read / batch tile
                      + B_pad * n_pad * out_isz
                      + (2 if expand else 1) * n_pad * 4)
    if expand:
        bytes_accessed += n_pad * n_pad * cdt.itemsize
    cost = pl.CostEstimate(flops=int(flops), transcendentals=0,
                           bytes_accessed=int(bytes_accessed))

    if expand:
        w2_spec = pl.BlockSpec((n_pad, n_pad), lambda i, k: (0, 0))
        out = pl.pallas_call(
            _mlp_expand_kernel,
            out_shape=out_shape,
            grid=grid,
            in_specs=[x_spec, w1_spec, b_spec, w2_spec, b_spec],
            out_specs=o_spec,
            scratch_shapes=scratch,
            compiler_params=cparams,
            cost_estimate=cost,
        )(x_p, prep["w1_t"], prep["b1_p"], prep["w2_t"], prep["b2_p"])
    else:
        out = pl.pallas_call(
            _mlp_plain_kernel,
            out_shape=out_shape,
            grid=grid,
            in_specs=[x_spec, w1_spec, b_spec],
            out_specs=o_spec,
            scratch_shapes=scratch,
            compiler_params=cparams,
            cost_estimate=cost,
        )(x_p, prep["w1_t"], prep["b1_p"])

    # Strip batch / lane padding only when padding was actually added.
    if B_pad == B and n_pad == num_classes:
        return out
    return out[:B, :num_classes]


# ---------------------------------------------------------------------------
# Deterministic parameter init (matches PyTorch Linear shapes / init scheme)
# ---------------------------------------------------------------------------
def init_mlp_params(key, input_dim, num_classes, expand_dim):
    def linear_init(k, out_f, in_f):
        kw, kb = jax.random.split(k)
        bound = 1.0 / jnp.sqrt(in_f)
        w = jax.random.uniform(kw, (out_f, in_f), jnp.float32, -bound, bound)
        b = jax.random.uniform(kb, (1, out_f), jnp.float32, -bound, bound)
        return w, b

    k1, k2 = jax.random.split(key)
    params = {}
    # self.linear (the surviving one): Linear(input_dim, num_classes)
    params["w1"], params["b1"] = linear_init(k1, num_classes, input_dim)
    if expand_dim:
        # self.linear2: Linear(expand_dim, num_classes)
        params["w2"], params["b2"] = linear_init(k2, num_classes, expand_dim)
    return params


# ---------------------------------------------------------------------------
# Reference (plain JAX) for sanity check
# ---------------------------------------------------------------------------
def mlp_reference(x, params, expand_dim):
    h = x @ params["w1"].T + params["b1"]
    if expand_dim:
        h = jnp.maximum(h, 0.0)
        h = h @ params["w2"].T + params["b2"]
    return h


if __name__ == "__main__":
    # Small shapes consistent with the module's forward. expand_dim must equal
    # num_classes for the (buggy) expand path to be shape-consistent.
    B, input_dim, num_classes = 8, 32, 16
    expand_dim = num_classes  # = 16

    key = jax.random.PRNGKey(0)
    kx, kp = jax.random.split(key)
    x = jax.random.normal(kx, (B, input_dim), jnp.float32)
    params = init_mlp_params(kp, input_dim, num_classes, expand_dim)
    ref = mlp_reference(x, params, expand_dim)

    # f32-operand path (expand): tight tolerance
    prep_f32 = prepare_params(params, expand_dim, compute_dtype=jnp.float32)
    out = jax.block_until_ready(mlp_forward(x, prep_f32))
    assert out.shape == (B, num_classes)
    assert jnp.allclose(out, ref, atol=1e-4, rtol=1e-4)

    # f32 single-linear path (expand_dim = 0)
    params0 = init_mlp_params(kp, input_dim, num_classes, 0)
    prep0 = prepare_params(params0, 0, compute_dtype=jnp.float32)
    out0 = jax.block_until_ready(mlp_forward(x, prep0))
    ref0 = mlp_reference(x, params0, 0)
    assert jnp.allclose(out0, ref0, atol=1e-4, rtol=1e-4)

    # Default bf16 MXU-operand path (accumulation / bias / ReLU stay f32)
    prep_bf = prepare_params(params, expand_dim)
    out_bf = jax.block_until_ready(mlp_forward(x, prep_bf))
    assert jnp.allclose(out_bf, ref, atol=3e-2, rtol=3e-2)

    # Exercise the K-reduction grid and a multi-block batch grid (small shapes).
    B2, in2, nc2 = 32, 384, 16
    x2 = jax.random.normal(jax.random.PRNGKey(1), (B2, in2), jnp.float32)
    params2 = init_mlp_params(jax.random.PRNGKey(2), in2, nc2, nc2)
    prep2 = prepare_params(params2, nc2, compute_dtype=jnp.float32, tile_k=128)
    out2 = jax.block_until_ready(mlp_forward(x2, prep2))
    ref2 = mlp_reference(x2, params2, nc2)
    assert jnp.allclose(out2, ref2, atol=1e-4, rtol=1e-4)

    print("KERNEL_OK")
</pallas_src>

<mosaic_0001>
module attributes {stable_mosaic.version = 11 : i64} {
  func.func @_mlp_expand_kernel(%arg0: i32, %arg1: i32, %arg2: memref<8x128xf32, #tpu.memory_space<vmem>>, %arg3: memref<128x128xf32, #tpu.memory_space<vmem>>, %arg4: memref<1x128xf32, #tpu.memory_space<vmem>>, %arg5: memref<128x128xf32, #tpu.memory_space<vmem>>, %arg6: memref<1x128xf32, #tpu.memory_space<vmem>>, %arg7: memref<8x128xf32, #tpu.memory_space<vmem>>, %arg8: memref<8x128xf32, #tpu.memory_space<vmem>>) attributes {dimension_semantics = [#tpu.dimension_semantics<parallel>, #tpu.dimension_semantics<arbitrary>], iteration_bounds = array<i64: 1, 1>, scalar_prefetch = 0 : i64, scratch_operands = 1 : i64, tpu.core_type = #tpu.core_type<tc>, window_params = [{transform_indices = @transform_0, window_bounds = array<i64: 8, 128>}, {transform_indices = @transform_1, window_bounds = array<i64: 128, 128>}, {pipeline_mode = #tpu.pipeline_mode<synchronous>, transform_indices = @transform_2, window_bounds = array<i64: 1, 128>}, {pipeline_mode = #tpu.pipeline_mode<synchronous>, transform_indices = @transform_3, window_bounds = array<i64: 128, 128>}, {pipeline_mode = #tpu.pipeline_mode<synchronous>, transform_indices = @transform_4, window_bounds = array<i64: 1, 128>}, {transform_indices = @transform_5, window_bounds = array<i64: 8, 128>}]} {
    %c0_i32 = arith.constant 0 : i32
    %0 = arith.cmpi eq, %arg1, %c0_i32 : i32
    %1 = arith.extui %0 : i1 to i32
    %c0_i32_0 = arith.constant 0 : i32
    %2 = arith.cmpi ne, %1, %c0_i32_0 : i32
    scf.if %2 {
      %cst_10 = arith.constant 0.000000e+00 : f32
      %12 = vector.broadcast %cst_10 : f32 to vector<8x128xf32>
      %c0_11 = arith.constant 0 : index
      %c0_12 = arith.constant 0 : index
      %13 = vector.load %arg8[%c0_11, %c0_12] : memref<8x128xf32, #tpu.memory_space<vmem>>, vector<8x128xf32>
      tpu.vector_store %arg8[%c0_11, %c0_12], %12 {strides = array<i32>} : memref<8x128xf32, #tpu.memory_space<vmem>>, vector<8x128xf32>,
    } else {
    }
    %c0 = arith.constant 0 : index
    %c0_1 = arith.constant 0 : index
    %3 = vector.load %arg8[%c0, %c0_1] : memref<8x128xf32, #tpu.memory_space<vmem>>, vector<8x128xf32>
    %c0_2 = arith.constant 0 : index
    %c0_3 = arith.constant 0 : index
    %4 = vector.load %arg2[%c0_2, %c0_3] : memref<8x128xf32, #tpu.memory_space<vmem>>, vector<8x128xf32>
    %c0_4 = arith.constant 0 : index
    %c0_5 = arith.constant 0 : index
    %5 = vector.load %arg3[%c0_4, %c0_5] : memref<128x128xf32, #tpu.memory_space<vmem>>, vector<128x128xf32>
    %cst = arith.constant dense<0.000000e+00> : vector<8x128xf32>
    %6 = tpu.matmul %4, %5, %cst {dimension_numbers = #tpu.dot_dimension_numbers<[1], [0], [0], [1], [0, 0, 1, 1], [], []>} : vector<8x128xf32>, vector<128x128xf32>, vector<8x128xf32> -> vector<8x128xf32>
    %7 = arith.addf %3, %6 : vector<8x128xf32>
    %c0_6 = arith.constant 0 : index
    %c0_7 = arith.constant 0 : index
    %8 = vector.load %arg8[%c0_6, %c0_7] : memref<8x128xf32, #tpu.memory_space<vmem>>, vector<8x128xf32>
    tpu.vector_store %arg8[%c0_6, %c0_7], %7 {strides = array<i32>} : memref<8x128xf32, #tpu.memory_space<vmem>>, vector<8x128xf32>,
    %c0_i32_8 = arith.constant 0 : i32
    %9 = arith.cmpi eq, %arg1, %c0_i32_8 : i32
    %10 = arith.extui %9 : i1 to i32
    %c0_i32_9 = arith.constant 0 : i32
    %11 = arith.cmpi ne, %10, %c0_i32_9 : i32
    scf.if %11 {
      %c0_10 = arith.constant 0 : index
      %c0_11 = arith.constant 0 : index
      %12 = vector.load %arg8[%c0_10, %c0_11] : memref<8x128xf32, #tpu.memory_space<vmem>>, vector<8x128xf32>
      %c0_12 = arith.constant 0 : index
      %c0_13 = arith.constant 0 : index
      %13 = vector.load %arg4[%c0_12, %c0_13] : memref<1x128xf32, #tpu.memory_space<vmem>>, vector<1x128xf32>
      %14 = vector.broadcast %13 : vector<1x128xf32> to vector<8x128xf32>
      %15 = arith.addf %12, %14 : vector<8x128xf32>
      %cst_14 = arith.constant 0.000000e+00 : f32
      %16 = vector.broadcast %cst_14 : f32 to vector<8x128xf32>
      %17 = arith.maximumf %15, %16 : vector<8x128xf32>
      %c0_15 = arith.constant 0 : index
      %c0_16 = arith.constant 0 : index
      %18 = vector.load %arg5[%c0_15, %c0_16] : memref<128x128xf32, #tpu.memory_space<vmem>>, vector<128x128xf32>
      %cst_17 = arith.constant dense<0.000000e+00> : vector<8x128xf32>
      %19 = tpu.matmul %17, %18, %cst_17 {dimension_numbers = #tpu.dot_dimension_numbers<[1], [0], [0], [1], [0, 0, 1, 1], [], []>} : vector<8x128xf32>, vector<128x128xf32>, vector<8x128xf32> -> vector<8x128xf32>
      %c0_18 = arith.constant 0 : index
      %c0_19 = arith.constant 0 : index
      %20 = vector.load %arg6[%c0_18, %c0_19] : memref<1x128xf32, #tpu.memory_space<vmem>>, vector<1x128xf32>
      %21 = vector.broadcast %20 : vector<1x128xf32> to vector<8x128xf32>
      %22 = arith.addf %19, %21 : vector<8x128xf32>
      %c0_20 = arith.constant 0 : index
      %c0_21 = arith.constant 0 : index
      %23 = vector.load %arg7[%c0_20, %c0_21] : memref<8x128xf32, #tpu.memory_space<vmem>>, vector<8x128xf32>
      tpu.vector_store %arg7[%c0_20, %c0_21], %22 {strides = array<i32>} : memref<8x128xf32, #tpu.memory_space<vmem>>, vector<8x128xf32>,
    } else {
    }
    return
  }
  func.func @transform_0(%arg0: i32, %arg1: i32) -> (i32, i32) {
    %c0_i32 = arith.constant 0 : i32
    return %arg0, %arg1 : i32, i32
  }
  func.func @transform_1(%arg0: i32, %arg1: i32) -> (i32, i32) {
    %c0_i32 = arith.constant 0 : i32
    %c0_i32_0 = arith.constant 0 : i32
    return %arg1, %c0_i32 : i32, i32
  }
  func.func @transform_2(%arg0: i32, %arg1: i32) -> (i32, i32) {
    %c0_i32 = arith.constant 0 : i32
    %c0_i32_0 = arith.constant 0 : i32
    %c0_i32_1 = arith.constant 0 : i32
    return %c0_i32, %c0_i32_0 : i32, i32
  }
  func.func @transform_3(%arg0: i32, %arg1: i32) -> (i32, i32) {
    %c0_i32 = arith.constant 0 : i32
    %c0_i32_0 = arith.constant 0 : i32
    %c0_i32_1 = arith.constant 0 : i32
    return %c0_i32, %c0_i32_0 : i32, i32
  }
  func.func @transform_4(%arg0: i32, %arg1: i32) -> (i32, i32) {
    %c0_i32 = arith.constant 0 : i32
    %c0_i32_0 = arith.constant 0 : i32
    %c0_i32_1 = arith.constant 0 : i32
    return %c0_i32, %c0_i32_0 : i32, i32
  }
  func.func @transform_5(%arg0: i32, %arg1: i32) -> (i32, i32) {
    %c0_i32 = arith.constant 0 : i32
    %c0_i32_0 = arith.constant 0 : i32
    return %arg0, %c0_i32 : i32, i32
  }
}

</mosaic_0001>

<llo_original>
// kernel: tpu_custom_call.1
$region0: #{tpu_custom_call.1}
  #allocation0 [shape = 'u32[]', space=smem, size = 0x4, offset = 0x4, fixed_abs, tag = 'smem constant byte address 0x4 - core index']
  #allocation1 [shape = 'u32[144,128]{1,0:T(1,128)}', space=vmem, size = 0x12000, scoped, tag = 'internal scratch']
  #allocation2 [shape = 'f32[8,128]{1,0:T(8,128)}', space=vmem, size = 0x1000, scoped, tag = 'scratch operand']
  %s0 = inlined_call_operand.hbm [shape: f32[8,128], index: 0, kind: input, shape index: {}]
  %s1 = inlined_call_operand.hbm [shape: f32[128,128], index: 1, kind: input, shape index: {}]
  %s2 = inlined_call_operand.vmem [shape: f32[1,128], index: 2, kind: input, shape index: {}]
  %s3 = inlined_call_operand.hbm [shape: f32[128,128], index: 3, kind: input, shape index: {}]
  %s4 = inlined_call_operand.vmem [shape: f32[1,128], index: 4, kind: input, shape index: {}]
  %s5 = inlined_call_operand.hbm [shape: f32[8,128], index: 5, kind: output, shape index: {}]
  %s6 = sld [smem:[#allocation0]]
  $region50: #{tpu_custom_call.1} parent=0
    _
  %s8 = ssub.s32 1, %s6
  %s9 = scalar_select 0, %s8, %s6
  $region1: #{tpu_custom_call.1} parent=0
    #allocation3 [shape = 'u8[4096]{0}', space=vmem, size = 0x1000, scoped, tag = 'input window, operand 0, single buffered']
    #allocation4 [shape = 's32[1]{0}', space=sflag, size = 0x4, scoped, tag = 'scoped memory for tpu_custom_call.1']
    #allocation5 [shape = 's32[1]{0}', space=sflag, size = 0x4, scoped, tag = 'scoped memory for tpu_custom_call.1']
    #allocation6 [shape = 'u8[65536]{0}', space=vmem, size = 0x10000, scoped, tag = 'input window, operand 1, single buffered']
    #allocation7 [shape = 's32[1]{0}', space=sflag, size = 0x4, scoped, tag = 'scoped memory for tpu_custom_call.1']
    #allocation8 [shape = 'u8[65536]{0}', space=vmem, size = 0x10000, scoped, tag = 'input window, operand 3, single buffered']
    #allocation9 [shape = 'u8[4096]{0}', space=vmem, size = 0x1000, scoped, tag = 'output window, operand 0, single buffered']
    %10 = vsyncpa [#allocation4], 0
    %11 = vsyncpa [#allocation7], 0
    %12 = vsyncpa [#allocation5], 0
    // Predicated region
    $region2: #{tpu_custom_call.1} parent=1 // pred_check
      _
    $region3: #{tpu_custom_call.1} parent=1 // pred_check_branch
      %14 = sbr.rel (0) target = $region5
    $region4: #{tpu_custom_call.1} parent=1 // pred_region
      %s16 = ssub.s32 128, 128
      %17 = vsyncadd [#allocation4], %s16
      %s19 = sshll.u32 [#allocation3], 4
      %s20 = int_to_ptr.vmem [resolvable:$true] %s19
      %22 = dma.hbm_to_vmem [thread:$0]  %s0, 128, %s20, [#allocation4]
    $region5: #{tpu_custom_call.1} parent=1 // pred_fallthru
      _
    // Predicated region
    $region6: #{tpu_custom_call.1} parent=1 // pred_check
      _
    $region7: #{tpu_custom_call.1} parent=1 // pred_check_branch
      %24 = sbr.rel (0) target = $region9
    $region8: #{tpu_custom_call.1} parent=1 // pred_region
      %s26 = ssub.s32 2048, 2048
      %27 = vsyncadd [#allocation7], %s26
      %s28 = sshll.u32 [#allocation6], 4
      %s29 = int_to_ptr.vmem [resolvable:$true] %s28
      %34 = dma.hbm_to_vmem [thread:$0]  %s1, 2048, %s29, [#allocation7], 128, 128, 8
    $region9: #{tpu_custom_call.1} parent=1 // pred_fallthru
      _
    // Predicated region
    $region10: #{tpu_custom_call.1} parent=1 // pred_check
      _
    $region11: #{tpu_custom_call.1} parent=1 // pred_check_branch
      %36 = sbr.rel (0) target = $region13
    $region12: #{tpu_custom_call.1} parent=1 // pred_region
      _
    $region13: #{tpu_custom_call.1} parent=1 // pred_fallthru
      _
    // Predicated region
    $region14: #{tpu_custom_call.1} parent=1 // pred_check
      _
    $region15: #{tpu_custom_call.1} parent=1 // pred_check_branch
      %38 = sbr.rel (0) target = $region17
    $region16: #{tpu_custom_call.1} parent=1 // pred_region
      %s40 = ssub.s32 2048, 2048
      %41 = vsyncadd [#allocation7], %s40
      %s42 = sshll.u32 [#allocation8], 4
      %s43 = int_to_ptr.vmem [resolvable:$true] %s42
      %48 = dma.hbm_to_vmem [thread:$0]  %s3, 2048, %s43, [#allocation7], 128, 128, 8
    $region17: #{tpu_custom_call.1} parent=1 // pred_fallthru
      _
    // Predicated region
    $region18: #{tpu_custom_call.1} parent=1 // pred_check
      _
    $region19: #{tpu_custom_call.1} parent=1 // pred_check_branch
      %50 = sbr.rel (0) target = $region21
    $region20: #{tpu_custom_call.1} parent=1 // pred_region
      _
    $region21: #{tpu_custom_call.1} parent=1 // pred_fallthru
      _
    // Predicated region
    $region22: #{tpu_custom_call.1} parent=1 // pred_check
      _
    $region23: #{tpu_custom_call.1} parent=1 // pred_check_branch
      %52 = sbr.rel (0) target = $region25
    $region24: #{tpu_custom_call.1} parent=1 // pred_region
      %53 = dma.done [#allocation4], 128
    $region25: #{tpu_custom_call.1} parent=1 // pred_fallthru
      _
    // Predicated region
    $region26: #{tpu_custom_call.1} parent=1 // pred_check
      _
    $region27: #{tpu_custom_call.1} parent=1 // pred_check_branch
      %55 = sbr.rel (0) target = $region29
    $region28: #{tpu_custom_call.1} parent=1 // pred_region
      %56 = dma.done [#allocation7], 2048
    $region29: #{tpu_custom_call.1} parent=1 // pred_fallthru
      _
    // Predicated region
    $region30: #{tpu_custom_call.1} parent=1 // pred_check
      _
    $region31: #{tpu_custom_call.1} parent=1 // pred_check_branch
      %58 = sbr.rel (0) target = $region33
    $region32: #{tpu_custom_call.1} parent=1 // pred_region
      %59 = dma.done [#allocation7], 2048
    $region33: #{tpu_custom_call.1} parent=1 // pred_fallthru
      _
    %p60 = scmp.eq.s32.totalorder 0, 0
    // Predicated region
    $region34: #{tpu_custom_call.1} parent=1 // pred_check
      %p61 = pneg %p60
    $region35: #{tpu_custom_call.1} parent=1 // pred_check_branch
      %63 = sbr.rel (%p61) target = $region37
    $region36: #{tpu_custom_call.1} parent=1 // pred_region
      %64 = vst [vmem:[#allocation2] sm:$0xff] 0.0
    $region37: #{tpu_custom_call.1} parent=1 // pred_fallthru
      _
    %v65 = vld [vmem:[#allocation2] sm:$0xff]
    %v66 = vld [vmem:[#allocation3] sm:$0xff]
    %v67 = vld [vmem:[#allocation6] sm:$0xff]
    %v68 = vld [vmem:[#allocation6 + $0x8] sm:$0xff]
    %v69 = vld [vmem:[#allocation6 + $0x10] sm:$0xff]
    %v70 = vld [vmem:[#allocation6 + $0x18] sm:$0xff]
    %v71 = vld [vmem:[#allocation6 + $0x20] sm:$0xff]
    %v72 = vld [vmem:[#allocation6 + $0x28] sm:$0xff]
    %v73 = vld [vmem:[#allocation6 + $0x30] sm:$0xff]
    %v74 = vld [vmem:[#allocation6 + $0x38] sm:$0xff]
    %v75 = vld [vmem:[#allocation6 + $0x40] sm:$0xff]
    %v76 = vld [vmem:[#allocation6 + $0x48] sm:$0xff]
    %v77 = vld [vmem:[#allocation6 + $0x50] sm:$0xff]
    %v78 = vld [vmem:[#allocation6 + $0x58] sm:$0xff]
    %v79 = vld [vmem:[#allocation6 + $0x60] sm:$0xff]
    %v80 = vld [vmem:[#allocation6 + $0x68] sm:$0xff]
    %v81 = vld [vmem:[#allocation6 + $0x70] sm:$0xff]
    %v82 = vld [vmem:[#allocation6 + $0x78] sm:$0xff]
    %83 = vmatprep.subr.mxu0 0.0
    %84 = vmatpush1.msra.mxu0 %v82
    %85 = vmatprep.subr.mxu0 0.0
    %86 = vmatpush1.msra.mxu0 %v81
    %87 = vmatprep.subr.mxu0 0.0
    %88 = vmatpush1.msra.mxu0 %v80
    %89 = vmatprep.subr.mxu0 0.0
    %90 = vmatpush1.msra.mxu0 %v79
    %91 = vmatprep.subr.mxu0 0.0
    %92 = vmatpush1.msra.mxu0 %v78
    %93 = vmatprep.subr.mxu0 0.0
    %94 = vmatpush1.msra.mxu0 %v77
    %95 = vmatprep.subr.mxu0 0.0
    %96 = vmatpush1.msra.mxu0 %v76
    %97 = vmatprep.subr.mxu0 0.0
    %98 = vmatpush1.msra.mxu0 %v75
    %99 = vmatprep.subr.mxu0 0.0
    %100 = vmatpush1.msra.mxu0 %v74
    %101 = vmatprep.subr.mxu0 0.0
    %102 = vmatpush1.msra.mxu0 %v73
    %103 = vmatprep.subr.mxu0 0.0
    %104 = vmatpush1.msra.mxu0 %v72
    %105 = vmatprep.subr.mxu0 0.0
    %106 = vmatpush1.msra.mxu0 %v71
    %107 = vmatprep.subr.mxu0 0.0
    %108 = vmatpush1.msra.mxu0 %v70
    %109 = vmatprep.subr.mxu0 0.0
    %110 = vmatpush1.msra.mxu0 %v69
    %111 = vmatprep.subr.mxu0 0.0
    %112 = vmatpush1.msra.mxu0 %v68
    %113 = vmatprep.subr.mxu0 0.0
    %114 = vmatpush1.msra.mxu0 %v67
    %115 = vmatprep.subr.mxu0 0.0
    %116 = vmatpush2.msra.mxu0 0.0
    %117 = vmatprep.subr.mxu0 0.0
    %118 = vmatpush2.msra.mxu0 0.0
    %119 = vmatprep.subr.mxu0 0.0
    %120 = vmatpush2.msra.mxu0 0.0
    %121 = vmatprep.subr.mxu0 0.0
    %122 = vmatpush2.msra.mxu0 0.0
    %123 = vmatprep.subr.mxu0 0.0
    %124 = vmatpush2.msra.mxu0 0.0
    %125 = vmatprep.subr.mxu0 0.0
    %126 = vmatpush2.msra.mxu0 0.0
    %127 = vmatprep.subr.mxu0 0.0
    %128 = vmatpush2.msra.mxu0 0.0
    %129 = vmatprep.subr.mxu0 0.0
    %130 = vmatpush2.msra.mxu0 0.0
    %131 = vmatprep.subr.mxu0 0.0
    %132 = vmatpush2.msra.mxu0 0.0
    %133 = vmatprep.subr.mxu0 0.0
    %134 = vmatpush2.msra.mxu0 0.0
    %135 = vmatprep.subr.mxu0 0.0
    %136 = vmatpush2.msra.mxu0 0.0
    %137 = vmatprep.subr.mxu0 0.0
    %138 = vmatpush2.msra.mxu0 0.0
    %139 = vmatprep.subr.mxu0 0.0
    %140 = vmatpush2.msra.mxu0 0.0
    %141 = vmatprep.subr.mxu0 0.0
    %142 = vmatpush2.msra.mxu0 0.0
    %143 = vmatprep.subr.mxu0 0.0
    %144 = vmatpush2.msra.mxu0 0.0
    %145 = vmatprep.subr.mxu0 0.0
    %146 = vmatpush2.msra.mxu0 0.0
    %147 = vmatprep.mubr.f32.mxu0 0.0
    %148 = vmatmul.mubr.f32.gmra.mxu0 %v66
    %v149 = vpop.f32.mrf.mxu0
    %v150 = vadd.f32 0.0, %v149
    %v151 = vpop.f32.mrf.mxu0
    %152 = vdwg.mxu0
    %v153 = vadd.f32 %v65, %v150
    %154 = vst [vmem:[#allocation2] sm:$0xff] %v153
    // Predicated region
    $region38: #{tpu_custom_call.1} parent=1 // pred_check
      %p155 = pneg %p60
    $region39: #{tpu_custom_call.1} parent=1 // pred_check_branch
      %157 = sbr.rel (%p155) target = $region41
    $region40: #{tpu_custom_call.1} parent=1 // pred_region
      %v158 = vld [vmem:[#allocation2] sm:$0xff]
      %v159 = vld [vmem:[%s2] sm:$0x1]
      %v161 = vlaneseq
      %v162 = vshrl.u32 %v161, 7
      %v163 = vsub.s32 0, %v162
      %v164 = vrot.slane %v159, %v163
      %v166 = vadd.f32 %v158, %v164
      %v167 = vmax.f32 %v166, 0.0
      %v168 = vld [vmem:[#allocation8] sm:$0xff]
      %v169 = vld [vmem:[#allocation8 + $0x8] sm:$0xff]
      %v170 = vld [vmem:[#allocation8 + $0x10] sm:$0xff]
      %v171 = vld [vmem:[#allocation8 + $0x18] sm:$0xff]
      %v172 = vld [vmem:[#allocation8 + $0x20] sm:$0xff]
      %v173 = vld [vmem:[#allocation8 + $0x28] sm:$0xff]
      %v174 = vld [vmem:[#allocation8 + $0x30] sm:$0xff]
      %v175 = vld [vmem:[#allocation8 + $0x38] sm:$0xff]
      %v176 = vld [vmem:[#allocation8 + $0x40] sm:$0xff]
      %v177 = vld [vmem:[#allocation8 + $0x48] sm:$0xff]
      %v178 = vld [vmem:[#allocation8 + $0x50] sm:$0xff]
      %v179 = vld [vmem:[#allocation8 + $0x58] sm:$0xff]
      %v180 = vld [vmem:[#allocation8 + $0x60] sm:$0xff]
      %v181 = vld [vmem:[#allocation8 + $0x68] sm:$0xff]
      %v182 = vld [vmem:[#allocation8 + $0x70] sm:$0xff]
      %v183 = vld [vmem:[#allocation8 + $0x78] sm:$0xff]
      %v184 = vld [vmem:[%s4] sm:$0x1]
      %v186 = vlaneseq
      %v187 = vshrl.u32 %v186, 7
      %v188 = vsub.s32 0, %v187
      %v189 = vrot.slane %v184, %v188
      %191 = vmatprep.subr.mxu0 0.0
      %192 = vmatpush1.msra.mxu0 %v183
      %193 = vmatprep.subr.mxu0 0.0
      %194 = vmatpush1.msra.mxu0 %v182
      %195 = vmatprep.subr.mxu0 0.0
      %196 = vmatpush1.msra.mxu0 %v181
      %197 = vmatprep.subr.mxu0 0.0
      %198 = vmatpush1.msra.mxu0 %v180
      %199 = vmatprep.subr.mxu0 0.0
      %200 = vmatpush1.msra.mxu0 %v179
      %201 = vmatprep.subr.mxu0 0.0
      %202 = vmatpush1.msra.mxu0 %v178
      %203 = vmatprep.subr.mxu0 0.0
      %204 = vmatpush1.msra.mxu0 %v177
      %205 = vmatprep.subr.mxu0 0.0
      %206 = vmatpush1.msra.mxu0 %v176
      %207 = vmatprep.subr.mxu0 0.0
      %208 = vmatpush1.msra.mxu0 %v175
      %209 = vmatprep.subr.mxu0 0.0
      %210 = vmatpush1.msra.mxu0 %v174
      %211 = vmatprep.subr.mxu0 0.0
      %212 = vmatpush1.msra.mxu0 %v173
      %213 = vmatprep.subr.mxu0 0.0
      %214 = vmatpush1.msra.mxu0 %v172
      %215 = vmatprep.subr.mxu0 0.0
      %216 = vmatpush1.msra.mxu0 %v171
      %217 = vmatprep.subr.mxu0 0.0
      %218 = vmatpush1.msra.mxu0 %v170
      %219 = vmatprep.subr.mxu0 0.0
      %220 = vmatpush1.msra.mxu0 %v169
      %221 = vmatprep.subr.mxu0 0.0
      %222 = vmatpush1.msra.mxu0 %v168
      %223 = vmatprep.subr.mxu0 0.0
      %224 = vmatpush2.msra.mxu0 0.0
      %225 = vmatprep.subr.mxu0 0.0
      %226 = vmatpush2.msra.mxu0 0.0
      %227 = vmatprep.subr.mxu0 0.0
      %228 = vmatpush2.msra.mxu0 0.0
      %229 = vmatprep.subr.mxu0 0.0
      %230 = vmatpush2.msra.mxu0 0.0
      %231 = vmatprep.subr.mxu0 0.0
      %232 = vmatpush2.msra.mxu0 0.0
      %233 = vmatprep.subr.mxu0 0.0
      %234 = vmatpush2.msra.mxu0 0.0
      %235 = vmatprep.subr.mxu0 0.0
      %236 = vmatpush2.msra.mxu0 0.0
      %237 = vmatprep.subr.mxu0 0.0
      %238 = vmatpush2.msra.mxu0 0.0
      %239 = vmatprep.subr.mxu0 0.0
      %240 = vmatpush2.msra.mxu0 0.0
      %241 = vmatprep.subr.mxu0 0.0
      %242 = vmatpush2.msra.mxu0 0.0
      %243 = vmatprep.subr.mxu0 0.0
      %244 = vmatpush2.msra.mxu0 0.0
      %245 = vmatprep.subr.mxu0 0.0
      %246 = vmatpush2.msra.mxu0 0.0
      %247 = vmatprep.subr.mxu0 0.0
      %248 = vmatpush2.msra.mxu0 0.0
      %249 = vmatprep.subr.mxu0 0.0
      %250 = vmatpush2.msra.mxu0 0.0
      %251 = vmatprep.subr.mxu0 0.0
      %252 = vmatpush2.msra.mxu0 0.0
      %253 = vmatprep.subr.mxu0 0.0
      %254 = vmatpush2.msra.mxu0 0.0
      %255 = vmatprep.mubr.f32.mxu0 0.0
      %256 = vmatmul.mubr.f32.gmra.mxu0 %v167
      %v257 = vpop.f32.mrf.mxu0
      %v258 = vadd.f32 %v189, %v257
      %v259 = vpop.f32.mrf.mxu0
      %260 = vdwg.mxu0
      %261 = vst [vmem:[#allocation9] sm:$0xff] %v258
    $region41: #{tpu_custom_call.1} parent=1 // pred_fallthru
      _
    // Predicated region
    $region42: #{tpu_custom_call.1} parent=1 // pred_check
      _
    $region43: #{tpu_custom_call.1} parent=1 // pred_check_branch
      %263 = sbr.rel (0) target = $region45
    $region44: #{tpu_custom_call.1} parent=1 // pred_region
      %s265 = ssub.s32 128, 128
      %266 = vsyncadd [#allocation5], %s265
      %s268 = sshll.u32 [#allocation9], 4
      %s269 = int_to_ptr.vmem [resolvable:$true] %s268
      %271 = dma.vmem_to_hbm [thread:$0]  %s269, 128, %s5, [#allocation5]
    $region45: #{tpu_custom_call.1} parent=1 // pred_fallthru
      _
    // Predicated region
    $region46: #{tpu_custom_call.1} parent=1 // pred_check
      _
    $region47: #{tpu_custom_call.1} parent=1 // pred_check_branch
      %273 = sbr.rel (0) target = $region49
    $region48: #{tpu_custom_call.1} parent=1 // pred_region
      %274 = dma.done [#allocation5], 128
    $region49: #{tpu_custom_call.1} parent=1 // pred_fallthru
      _
    %275 = vsyncpa [#allocation4], 1
    %276 = vsyncpa [#allocation7], 1
    %277 = vsyncpa [#allocation5], 1

</llo_original>
